<compile_context>
chip_gen: v7x
topology: tpu7x:2x2x1
jax: 0.10.0
libtpu: 0.0.40
codegen_flags: <defaults>
</compile_context>

<pallas_src>
import functools

import numpy as np

import jax
import jax.numpy as jnp
from jax.experimental import pallas as pl
from jax.experimental.pallas import tpu as pltpu


# ----------------------------------------------------------------------------
# helpers
# ----------------------------------------------------------------------------
def _pick_batch_tile(b, max_tile=512):
    """Largest row tile <= max_tile that divides b and is a multiple of 8.

    Falls back to the full batch extent (always legal as a block shape).
    Cap of 512 rows keeps the double-buffered footprint small enough for
    v7x's 64 MiB VMEM while already hitting ~HBM roofline for mem-bound ops.
    """
    if b <= max_tile:
        return b
    t = max_tile
    while t >= 8:
        if b % t == 0:
            return t
        t //= 2
    return b


def _round_up(x, m):
    return ((x + m - 1) // m) * m


# ----------------------------------------------------------------------------
# Pallas kernels
# ----------------------------------------------------------------------------
def _concat_kernel(*refs):
    """Concatenate N input refs (Bt, D_k) along last axis into out ref (Bt, sum D_k)."""
    in_refs = refs[:-1]
    out_ref = refs[-1]
    off = 0
    for r in in_refs:
        d = r.shape[-1]
        out_ref[:, off:off + d] = r[...]
        off += d


def _fused_one_hot_kernel(idx_ref, feat_sel_ref, lane_class_ref, out_ref, *, n_hot):
    """Fused one-hot for all dim>1 features into one lane-dense slab.

    idx_ref        : (Bt, n_hot) int32 -- per-row class index for each hot feature.
    feat_sel_ref   : (n_hot, P)  int32 -- feat_sel[f, j] = 1 iff lane j belongs to feature f.
    lane_class_ref : (1, P)      int32 -- class index of lane j within its feature
                                          (-1 on padding lanes).
    out_ref        : (Bt, P)   float32 -- P = sum(dims) rounded up to 128.
    """
    bt, p = out_ref.shape
    idxs = idx_ref[...]                                   # (Bt, n_hot) int32
    feat_sel = feat_sel_ref[...]                          # (n_hot, P)  int32
    # Build per-lane target index: target[b, j] = idxs[b, feature_of(j)].
    # Padding lanes keep target 0 and compare against class -1 -> always 0.
    target = jnp.zeros((bt, p), jnp.int32)
    for f in range(n_hot):                                # static unroll (n_hot is tiny)
        target = target + idxs[:, f:f + 1] * feat_sel[f:f + 1, :]
    # Single full-slab unmasked store (lane-dense output).
    out_ref[...] = (target == lane_class_ref[...]).astype(jnp.float32)


# ----------------------------------------------------------------------------
# Wrappers
# ----------------------------------------------------------------------------
def concat_last_dim(arrays, batch_tile=None):
    """Pallas concat of a list of (B, D_k) arrays along the last dim."""
    b = arrays[0].shape[0]
    dtype = jnp.result_type(*arrays)
    arrays = [a.astype(dtype) for a in arrays]
    dims = [int(a.shape[-1]) for a in arrays]
    total = int(sum(dims))

    bt = batch_tile if batch_tile is not None else _pick_batch_tile(b)
    assert b % bt == 0, "batch tile must divide batch"
    grid = (b // bt,)

    # NOTE: index_map does not capture loop variables (avoids late-binding bug).
    in_specs = [pl.BlockSpec((bt, d), lambda i: (i, 0)) for d in dims]
    out_spec = pl.BlockSpec((bt, total), lambda i: (i, 0))

    itemsize = jnp.dtype(dtype).itemsize
    cost = pl.CostEstimate(
        flops=0,
        transcendentals=0,
        bytes_accessed=2 * b * total * itemsize,
    )
    return pl.pallas_call(
        _concat_kernel,
        out_shape=jax.ShapeDtypeStruct((b, total), dtype),
        grid=grid,
        in_specs=in_specs,
        out_specs=out_spec,
        compiler_params=pltpu.CompilerParams(
            dimension_semantics=("parallel",)),
        cost_estimate=cost,
    )(*arrays)


def fused_one_hot_pallas(idx, dims, batch_tile=None):
    """One fused Pallas call: idx (B, n_hot) int -> list of (B, dims[f]) f32 one-hots."""
    dims = [int(d) for d in dims]
    b, n_hot = idx.shape
    assert n_hot == len(dims) and n_hot > 0
    idx = idx.astype(jnp.int32)

    total = int(sum(dims))
    p = _round_up(total, 128)                    # lane-dense padded slab width
    offsets = np.cumsum([0] + dims)[:-1]

    # Compile-time lookup tables, passed as real kernel INPUTS (not captured).
    lane_class_np = np.full((1, p), -1, np.int32)
    feat_sel_np = np.zeros((n_hot, p), np.int32)
    for f, (off, d) in enumerate(zip(offsets, dims)):
        lane_class_np[0, off:off + d] = np.arange(d, dtype=np.int32)
        feat_sel_np[f, off:off + d] = 1
    lane_class = jnp.asarray(lane_class_np)
    feat_sel = jnp.asarray(feat_sel_np)

    bt = batch_tile if batch_tile is not None else _pick_batch_tile(b)
    assert b % bt == 0, "batch tile must divide batch"
    grid = (b // bt,)

    kernel = functools.partial(_fused_one_hot_kernel, n_hot=n_hot)

    cost = pl.CostEstimate(
        flops=b * p * (2 * n_hot + 1),
        transcendentals=0,
        bytes_accessed=b * n_hot * 4 + (n_hot + 1) * p * 4 + b * p * 4,
    )
    slab = pl.pallas_call(
        kernel,
        out_shape=jax.ShapeDtypeStruct((b, p), jnp.float32),
        grid=grid,
        in_specs=[
            pl.BlockSpec((bt, n_hot), lambda i: (i, 0)),     # row indices tile
            pl.BlockSpec((n_hot, p), lambda i: (0, 0)),      # feat_sel (full, resident)
            pl.BlockSpec((1, p), lambda i: (0, 0)),          # lane_class (full, resident)
        ],
        out_specs=pl.BlockSpec((bt, p), lambda i: (i, 0)),
        compiler_params=pltpu.CompilerParams(
            dimension_semantics=("parallel",)),
        cost_estimate=cost,
    )(idx, feat_sel, lane_class)

    # Split the lane-dense slab back into per-feature one-hots outside the kernel.
    return [slab[:, off:off + d] for off, d in zip(offsets, dims)]


class IdentityEncoder:
    """JAX/Pallas port of fcdl.model.encoder.IdentityEncoder (chemical_train=True path)."""

    def __init__(self, obs_keys, obs_spec, continuous_state, feature_inner_dim=None):
        # keys whose spec is 1-D
        self.keys = [k for k in obs_keys if obs_spec[k].ndim == 1]
        self.feature_dim = int(sum(len(obs_spec[k]) for k in self.keys))
        self.continuous_state = continuous_state
        self.feature_inner_dim = feature_inner_dim
        self.chemical_train = True
        self.chemical_match_type_train = list(range(len(self.keys)))

    def forward(self, obs, detach=False):
        if self.continuous_state:
            return concat_last_dim([obs[k] for k in self.keys])

        # --- discrete path ---------------------------------------------------
        # unbind along last dim
        flat = []
        for k in self.keys:
            x = obs[k]
            for i in range(x.shape[-1]):
                flat.append(x[..., i])

        dims = [int(d) for d in self.feature_inner_dim]
        assert len(flat) == len(dims)

        hot_pos = [i for i, d in enumerate(dims) if d > 1]
        hot_parts = []
        if hot_pos:
            # Single (B, n_hot) int32 index tensor -> one fused pallas_call.
            idx = jnp.stack([flat[i] for i in hot_pos], axis=-1).astype(jnp.int32)
            hot_parts = fused_one_hot_pallas(idx, [dims[i] for i in hot_pos])

        out = []
        hp = 0
        for obs_i, dim_i in zip(flat, dims):
            if dim_i > 1:
                out.append(hot_parts[hp])
                hp += 1
            else:
                # unsqueeze(-1): pure reshape glue, dtype preserved
                out.append(obs_i[..., None])
        # chemical_train is always True here -> return the list as-is
        # TODO(synk): chemical_train=False test-time noise branch (torch.randn_like
        # scaling of selected variables) is not implemented; train path only.
        return out

    __call__ = forward


# ----------------------------------------------------------------------------
# main
# ----------------------------------------------------------------------------
if __name__ == "__main__":
    key = jax.random.PRNGKey(0)
    B = 2

    # ---- continuous_state = True --------------------------------------------
    obs_spec_c = {"obs_a": jnp.zeros((3,)), "obs_b": jnp.zeros((5,))}
    enc_c = IdentityEncoder(
        obs_keys=["obs_a", "obs_b"],
        obs_spec=obs_spec_c,
        continuous_state=True,
    )
    k1, k2, key = jax.random.split(key, 3)
    obs_c = {
        "obs_a": jax.random.normal(k1, (B, 3), dtype=jnp.float32),
        "obs_b": jax.random.normal(k2, (B, 5), dtype=jnp.float32),
    }
    out_c = enc_c(obs_c)
    out_c = jax.block_until_ready(out_c)
    ref_c = jnp.concatenate([obs_c["obs_a"], obs_c["obs_b"]], axis=-1)
    assert out_c.shape == (B, enc_c.feature_dim)
    assert jnp.allclose(out_c, ref_c)

    # extra check: exercise the batch grid (grid > 1, "parallel" tiling)
    k5, k6, key = jax.random.split(key, 3)
    big_a = jax.random.normal(k5, (16, 3), dtype=jnp.float32)
    big_b = jax.random.normal(k6, (16, 5), dtype=jnp.float32)
    out_big = jax.block_until_ready(concat_last_dim([big_a, big_b], batch_tile=8))
    assert jnp.allclose(out_big, jnp.concatenate([big_a, big_b], axis=-1))

    # ---- continuous_state = False (fused one-hot path) -----------------------
    # obs_a has 3 discrete features, obs_b has 2 -> feature_inner_dim length 5
    feature_inner_dim = [4, 5, 1, 6, 3]
    obs_spec_d = {"obs_a": jnp.zeros((3,)), "obs_b": jnp.zeros((2,))}
    enc_d = IdentityEncoder(
        obs_keys=["obs_a", "obs_b"],
        obs_spec=obs_spec_d,
        continuous_state=False,
        feature_inner_dim=feature_inner_dim,
    )
    k3, k4, key = jax.random.split(key, 3)
    obs_d = {
        "obs_a": jax.random.randint(k3, (B, 3), 0, 4).astype(jnp.float32),
        "obs_b": jax.random.randint(k4, (B, 2), 0, 3).astype(jnp.float32),
    }
    out_d = enc_d(obs_d)
    out_d = jax.block_until_ready(out_d)

    # reference check
    flat_ref = [obs_d["obs_a"][:, i] for i in range(3)] + \
               [obs_d["obs_b"][:, i] for i in range(2)]
    for o, r, d in zip(out_d, flat_ref, feature_inner_dim):
        if d > 1:
            ref = jax.nn.one_hot(r.astype(jnp.int32), d, dtype=jnp.float32)
            assert o.shape == (B, d)
            assert jnp.allclose(o, ref)
        else:
            assert o.shape == (B, 1)
            assert jnp.allclose(o, r[:, None])

    # extra check: batch grid > 1 on the fused one-hot path as well
    k7, key = jax.random.split(key)
    idx_big = jax.random.randint(k7, (16, 4), 0, 3)
    hots_big = fused_one_hot_pallas(idx_big, [4, 5, 6, 3], batch_tile=8)
    hots_big = jax.block_until_ready(hots_big)
    for f, d in enumerate([4, 5, 6, 3]):
        ref = jax.nn.one_hot(idx_big[:, f], d, dtype=jnp.float32)
        assert jnp.allclose(hots_big[f], ref)

    print("KERNEL_OK")
</pallas_src>

<mosaic_0001>
module attributes {stable_mosaic.version = 11 : i64} {
  func.func @_concat_kernel(%arg0: i32, %arg1: memref<2x3xf32, #tpu.memory_space<vmem>>, %arg2: memref<2x5xf32, #tpu.memory_space<vmem>>, %arg3: memref<2x8xf32, #tpu.memory_space<vmem>>) attributes {dimension_semantics = [#tpu.dimension_semantics<parallel>], iteration_bounds = array<i64: 1>, scalar_prefetch = 0 : i64, scratch_operands = 0 : i64, tpu.core_type = #tpu.core_type<tc>, window_params = [{transform_indices = @transform_0, window_bounds = array<i64: 2, 3>}, {transform_indices = @transform_1, window_bounds = array<i64: 2, 5>}, {transform_indices = @transform_2, window_bounds = array<i64: 2, 8>}]} {
    %c0 = arith.constant 0 : index
    %c0_0 = arith.constant 0 : index
    %0 = vector.load %arg1[%c0, %c0_0] : memref<2x3xf32, #tpu.memory_space<vmem>>, vector<2x3xf32>
    %c0_1 = arith.constant 0 : index
    %c0_2 = arith.constant 0 : index
    %1 = vector.load %arg3[%c0_1, %c0_2] : memref<2x8xf32, #tpu.memory_space<vmem>>, vector<2x3xf32>
    tpu.vector_store %arg3[%c0_1, %c0_2], %0 {strides = array<i32>} : memref<2x8xf32, #tpu.memory_space<vmem>>, vector<2x3xf32>,
    %c0_3 = arith.constant 0 : index
    %c0_4 = arith.constant 0 : index
    %2 = vector.load %arg2[%c0_3, %c0_4] : memref<2x5xf32, #tpu.memory_space<vmem>>, vector<2x5xf32>
    %c0_5 = arith.constant 0 : index
    %c3 = arith.constant 3 : index
    %3 = vector.load %arg3[%c0_5, %c3] : memref<2x8xf32, #tpu.memory_space<vmem>>, vector<2x5xf32>
    tpu.vector_store %arg3[%c0_5, %c3], %2 {strides = array<i32>} : memref<2x8xf32, #tpu.memory_space<vmem>>, vector<2x5xf32>,
    return
  }
  func.func @transform_0(%arg0: i32) -> (i32, i32) {
    %c0_i32 = arith.constant 0 : i32
    %c0_i32_0 = arith.constant 0 : i32
    return %arg0, %c0_i32 : i32, i32
  }
  func.func @transform_1(%arg0: i32) -> (i32, i32) {
    %c0_i32 = arith.constant 0 : i32
    %c0_i32_0 = arith.constant 0 : i32
    return %arg0, %c0_i32 : i32, i32
  }
  func.func @transform_2(%arg0: i32) -> (i32, i32) {
    %c0_i32 = arith.constant 0 : i32
    %c0_i32_0 = arith.constant 0 : i32
    return %arg0, %c0_i32 : i32, i32
  }
}

</mosaic_0001>

<llo_original>
// kernel: tpu_custom_call.1
$region0: #{tpu_custom_call.1}
  #allocation0 [shape = 'u32[]', space=smem, size = 0x4, offset = 0x4, fixed_abs, tag = 'smem constant byte address 0x4 - core index']
  #allocation1 [shape = 'u32[144,128]{1,0:T(1,128)}', space=vmem, size = 0x12000, scoped, tag = 'internal scratch']
  %s0 = inlined_call_operand.hbm [shape: f32[2,3], index: 0, kind: input, shape index: {}]
  %s1 = inlined_call_operand.vmem [shape: f32[2,5], index: 1, kind: input, shape index: {}]
  %s2 = inlined_call_operand.hbm [shape: f32[2,8], index: 2, kind: output, shape index: {}]
  %s3 = sld [smem:[#allocation0]]
  $region22: #{tpu_custom_call.1} parent=0
    _
  %s5 = ssub.s32 1, %s3
  %s6 = scalar_select 0, %s5, %s3
  $region1: #{tpu_custom_call.1} parent=0
    #allocation2 [shape = 'u8[1024]{0}', space=vmem, size = 0x400, scoped, tag = 'input window, operand 0, single buffered']
    #allocation3 [shape = 's32[1]{0}', space=sflag, size = 0x4, scoped, tag = 'scoped memory for tpu_custom_call.1']
    #allocation4 [shape = 's32[1]{0}', space=sflag, size = 0x4, scoped, tag = 'scoped memory for tpu_custom_call.1']
    #allocation5 [shape = 'u8[1024]{0}', space=vmem, size = 0x400, scoped, tag = 'output window, operand 0, single buffered']
    %7 = vsyncpa [#allocation3], 0
    %8 = vsyncpa [#allocation4], 0
    // Predicated region
    $region2: #{tpu_custom_call.1} parent=1 // pred_check
      _
    $region3: #{tpu_custom_call.1} parent=1 // pred_check_branch
      %10 = sbr.rel (0) target = $region5
    $region4: #{tpu_custom_call.1} parent=1 // pred_region
      %s12 = ssub.s32 32, 32
      %13 = vsyncadd [#allocation3], %s12
      %s15 = sshll.u32 [#allocation2], 4
      %s16 = int_to_ptr.vmem [resolvable:$true] %s15
      %18 = dma.hbm_to_vmem [thread:$0]  %s0, 32, %s16, [#allocation3]
    $region5: #{tpu_custom_call.1} parent=1 // pred_fallthru
      _
    // Predicated region
    $region6: #{tpu_custom_call.1} parent=1 // pred_check
      _
    $region7: #{tpu_custom_call.1} parent=1 // pred_check_branch
      %20 = sbr.rel (0) target = $region9
    $region8: #{tpu_custom_call.1} parent=1 // pred_region
      _
    $region9: #{tpu_custom_call.1} parent=1 // pred_fallthru
      _
    // Predicated region
    $region10: #{tpu_custom_call.1} parent=1 // pred_check
      _
    $region11: #{tpu_custom_call.1} parent=1 // pred_check_branch
      %22 = sbr.rel (0) target = $region13
    $region12: #{tpu_custom_call.1} parent=1 // pred_region
      %23 = dma.done [#allocation3], 32
    $region13: #{tpu_custom_call.1} parent=1 // pred_fallthru
      _
    %v24 = vld [vmem:[#allocation2] sm:$0x3]
    %vm25 = vcmask 17408
    %26 = vst.msk [vmem:[#allocation5] sm:$0x3] %vm25, %v24
    %v27 = vld [vmem:[%s1] sm:$0x3]
    %29 = vrot.lane.b32.xlu0 %v27, 3
    %v30 = vpop.permute.xlu0 %29
    %vm32 = vcmask 58392
    %33 = vst.msk [vmem:[#allocation5] sm:$0x3] %vm32, %v30
    // Predicated region
    $region14: #{tpu_custom_call.1} parent=1 // pred_check
      _
    $region15: #{tpu_custom_call.1} parent=1 // pred_check_branch
      %35 = sbr.rel (0) target = $region17
    $region16: #{tpu_custom_call.1} parent=1 // pred_region
      %s37 = ssub.s32 32, 32
      %38 = vsyncadd [#allocation4], %s37
      %s40 = sshll.u32 [#allocation5], 4
      %s41 = int_to_ptr.vmem [resolvable:$true] %s40
      %43 = dma.vmem_to_hbm [thread:$0]  %s41, 32, %s2, [#allocation4]
    $region17: #{tpu_custom_call.1} parent=1 // pred_fallthru
      _
    // Predicated region
    $region18: #{tpu_custom_call.1} parent=1 // pred_check
      _
    $region19: #{tpu_custom_call.1} parent=1 // pred_check_branch
      %45 = sbr.rel (0) target = $region21
    $region20: #{tpu_custom_call.1} parent=1 // pred_region
      %46 = dma.done [#allocation4], 32
    $region21: #{tpu_custom_call.1} parent=1 // pred_fallthru
      _
    %47 = vsyncpa [#allocation3], 1
    %48 = vsyncpa [#allocation4], 1

</llo_original>
